<compile_context>
chip_gen: v7x
topology: tpu7x:2x2x1
jax: 0.10.0
libtpu: 0.0.40
codegen_flags: <defaults>
</compile_context>

<pallas_src>
import jax
import jax.numpy as jnp
from jax.experimental import pallas as pl
from jax.experimental.pallas import tpu as pltpu


def _round_up(x, m):
    return ((x + m - 1) // m) * m


def _mlp_kernel(user_ref, rest_ref,
                w1a_ref, w1b_ref, b1_ref,
                w2_ref, b2_ref,
                w3_ref, b3_ref,
                out_ref):
    # user_ref / rest_ref: [TILE_B, E] f32 (rest is already the mean over R)
    u = user_ref[...]
    r = rest_ref[...]

    # hidden layer 1: split-K matmul replaces concat([u, r]) @ w1
    h1 = (jnp.dot(u, w1a_ref[...], preferred_element_type=jnp.float32)
          + jnp.dot(r, w1b_ref[...], preferred_element_type=jnp.float32)
          + b1_ref[...])
    h1 = jnp.maximum(h1, 0.0)

    # hidden layer 2 + ReLU
    h2 = jnp.dot(h1, w2_ref[...], preferred_element_type=jnp.float32) + b2_ref[...]
    h2 = jnp.maximum(h2, 0.0)

    # output layer (padded to 128 lanes) + sigmoid; column 0 is the real output
    logits = jnp.dot(h2, w3_ref[...], preferred_element_type=jnp.float32) + b3_ref[...]
    out_ref[...] = jax.nn.sigmoid(logits)


def network_forward(net_input, params, tile_b=512):
    """net_input: int32 [B, 1+R]; column 0 = user id, columns 1: = restaurant ids."""
    user_tbl = params["user_embedding"]          # [U, E]
    rest_tbl = params["restaurant_embedding"]    # [Rsz, E]
    w1, b1 = params["w1"], params["b1"]          # [2E, H1], [H1]
    w2, b2 = params["w2"], params["b2"]          # [H1, H2], [H2]
    w3, b3 = params["w3"], params["b3"]          # [H2, 1],  [1]

    B = net_input.shape[0]
    E = user_tbl.shape[1]
    H1 = w1.shape[1]
    H2 = w2.shape[1]

    # ---- glue (plain JAX, fused by XLA): gathers + restaurant mean ---------
    user_emb = jnp.take(user_tbl, net_input[:, 0], axis=0)                    # [B, E]
    rest_mean = jnp.mean(jnp.take(rest_tbl, net_input[:, 1:], axis=0), axis=1)  # [B, E]

    # ---- pad weight output dims to lane-dense multiples of 128 -------------
    H1p = _round_up(H1, 128)
    H2p = _round_up(H2, 128)
    OUTP = 128

    w1a = jnp.pad(w1[:E, :], ((0, 0), (0, H1p - H1)))        # [E, H1p]
    w1b = jnp.pad(w1[E:, :], ((0, 0), (0, H1p - H1)))        # [E, H1p]
    b1p = jnp.pad(b1, (0, H1p - H1)).reshape(1, H1p)         # [1, H1p]
    w2p = jnp.pad(w2, ((0, H1p - H1), (0, H2p - H2)))        # [H1p, H2p]
    b2p = jnp.pad(b2, (0, H2p - H2)).reshape(1, H2p)         # [1, H2p]
    w3p = jnp.pad(w3, ((0, H2p - H2), (0, OUTP - 1)))        # [H2p, 128]
    b3p = jnp.pad(b3.reshape(1, 1), ((0, 0), (0, OUTP - 1))) # [1, 128]

    # ---- batch tiling (sublane-aligned) -------------------------------------
    TILE_B = min(tile_b, _round_up(B, 8))
    TILE_B = _round_up(TILE_B, 8)
    Bp = _round_up(B, TILE_B)
    if Bp != B:
        pad_rows = Bp - B
        user_emb = jnp.pad(user_emb, ((0, pad_rows), (0, 0)))
        rest_mean = jnp.pad(rest_mean, ((0, pad_rows), (0, 0)))

    grid = (Bp // TILE_B,)

    out_full = pl.pallas_call(
        _mlp_kernel,
        out_shape=jax.ShapeDtypeStruct((Bp, OUTP), jnp.float32),
        grid_spec=pltpu.PrefetchScalarGridSpec(
            num_scalar_prefetch=0,
            grid=grid,
            in_specs=[
                # per-batch-tile activations
                pl.BlockSpec((TILE_B, E), lambda i: (i, 0)),
                pl.BlockSpec((TILE_B, E), lambda i: (i, 0)),
                # VMEM-resident weights / biases (same block every step)
                pl.BlockSpec((E, H1p), lambda i: (0, 0)),
                pl.BlockSpec((E, H1p), lambda i: (0, 0)),
                pl.BlockSpec((1, H1p), lambda i: (0, 0)),
                pl.BlockSpec((H1p, H2p), lambda i: (0, 0)),
                pl.BlockSpec((1, H2p), lambda i: (0, 0)),
                pl.BlockSpec((H2p, OUTP), lambda i: (0, 0)),
                pl.BlockSpec((1, OUTP), lambda i: (0, 0)),
            ],
            out_specs=pl.BlockSpec((TILE_B, OUTP), lambda i: (i, 0)),
        ),
        compiler_params=pltpu.CompilerParams(
            dimension_semantics=("parallel",)),
    )(user_emb, rest_mean, w1a, w1b, b1p, w2p, b2p, w3p, b3p)

    # Drop padded batch rows and padded lanes; column 0 is the real output.
    return out_full[:B, 0:1]


def init_params(key, hidden1, hidden2, users_size, restaurants_size, embedding_size):
    ks = jax.random.split(key, 8)
    f32 = jnp.float32
    params = {
        "user_embedding": jax.random.normal(ks[0], (users_size, embedding_size), f32),
        "restaurant_embedding": jax.random.normal(ks[1], (restaurants_size, embedding_size), f32),
        # weights stored [in, out] (transposed w.r.t. torch.nn.Linear.weight)
        "w1": jax.random.normal(ks[2], (2 * embedding_size, hidden1), f32) * 0.1,
        "b1": jax.random.normal(ks[3], (hidden1,), f32) * 0.1,
        "w2": jax.random.normal(ks[4], (hidden1, hidden2), f32) * 0.1,
        "b2": jax.random.normal(ks[5], (hidden2,), f32) * 0.1,
        "w3": jax.random.normal(ks[6], (hidden2, 1), f32) * 0.1,
        "b3": jax.random.normal(ks[7], (1,), f32) * 0.1,
    }
    return params


def reference_forward(net_input, params):
    """Pure-JAX reference mirroring the PyTorch module exactly."""
    user_emb = jnp.take(params["user_embedding"], net_input[:, 0], axis=0)
    rest_mean = jnp.mean(jnp.take(params["restaurant_embedding"], net_input[:, 1:], axis=0), axis=1)
    flow = jnp.concatenate([user_emb, rest_mean], axis=1)
    flow = jax.nn.relu(flow @ params["w1"] + params["b1"])
    flow = jax.nn.relu(flow @ params["w2"] + params["b2"])
    return jax.nn.sigmoid(flow @ params["w3"] + params["b3"])


if __name__ == "__main__":
    # Small shapes consistent with the module's forward.
    B = 8                 # batch
    R = 4                 # restaurants per sample (net_input has 1 + R columns)
    users_size = 32
    restaurants_size = 64
    embedding_size = 16
    hidden1 = 64
    hidden2 = 32

    key = jax.random.PRNGKey(0)
    kp, ku, kr = jax.random.split(key, 3)
    params = init_params(kp, hidden1, hidden2, users_size, restaurants_size, embedding_size)

    user_ids = jax.random.randint(ku, (B, 1), 0, users_size, dtype=jnp.int32)
    rest_ids = jax.random.randint(kr, (B, R), 0, restaurants_size, dtype=jnp.int32)
    net_input = jnp.concatenate([user_ids, rest_ids], axis=1)   # [B, 1+R] int32

    out = network_forward(net_input, params)
    out = jax.block_until_ready(out)

    ref = jax.block_until_ready(reference_forward(net_input, params))
    assert out.shape == (B, 1)
    assert jnp.allclose(out, ref, atol=1e-5, rtol=1e-5), (out, ref)

    print("KERNEL_OK")
</pallas_src>

<mosaic_0001>
module attributes {stable_mosaic.version = 11 : i64} {
  func.func @_mlp_kernel(%arg0: i32, %arg1: memref<8x16xf32, #tpu.memory_space<vmem>>, %arg2: memref<8x16xf32, #tpu.memory_space<vmem>>, %arg3: memref<16x128xf32, #tpu.memory_space<vmem>>, %arg4: memref<16x128xf32, #tpu.memory_space<vmem>>, %arg5: memref<1x128xf32, #tpu.memory_space<vmem>>, %arg6: memref<128x128xf32, #tpu.memory_space<vmem>>, %arg7: memref<1x128xf32, #tpu.memory_space<vmem>>, %arg8: memref<128x128xf32, #tpu.memory_space<vmem>>, %arg9: memref<1x128xf32, #tpu.memory_space<vmem>>, %arg10: memref<8x128xf32, #tpu.memory_space<vmem>>) attributes {dimension_semantics = [#tpu.dimension_semantics<parallel>], iteration_bounds = array<i64: 1>, scalar_prefetch = 0 : i64, scratch_operands = 0 : i64, tpu.core_type = #tpu.core_type<tc>, window_params = [{transform_indices = @transform_0, window_bounds = array<i64: 8, 16>}, {transform_indices = @transform_1, window_bounds = array<i64: 8, 16>}, {pipeline_mode = #tpu.pipeline_mode<synchronous>, transform_indices = @transform_2, window_bounds = array<i64: 16, 128>}, {pipeline_mode = #tpu.pipeline_mode<synchronous>, transform_indices = @transform_3, window_bounds = array<i64: 16, 128>}, {pipeline_mode = #tpu.pipeline_mode<synchronous>, transform_indices = @transform_4, window_bounds = array<i64: 1, 128>}, {pipeline_mode = #tpu.pipeline_mode<synchronous>, transform_indices = @transform_5, window_bounds = array<i64: 128, 128>}, {pipeline_mode = #tpu.pipeline_mode<synchronous>, transform_indices = @transform_6, window_bounds = array<i64: 1, 128>}, {pipeline_mode = #tpu.pipeline_mode<synchronous>, transform_indices = @transform_7, window_bounds = array<i64: 128, 128>}, {pipeline_mode = #tpu.pipeline_mode<synchronous>, transform_indices = @transform_8, window_bounds = array<i64: 1, 128>}, {transform_indices = @transform_9, window_bounds = array<i64: 8, 128>}]} {
    %c0 = arith.constant 0 : index
    %c0_0 = arith.constant 0 : index
    %0 = vector.load %arg1[%c0, %c0_0] : memref<8x16xf32, #tpu.memory_space<vmem>>, vector<8x16xf32>
    %c0_1 = arith.constant 0 : index
    %c0_2 = arith.constant 0 : index
    %1 = vector.load %arg2[%c0_1, %c0_2] : memref<8x16xf32, #tpu.memory_space<vmem>>, vector<8x16xf32>
    %c0_3 = arith.constant 0 : index
    %c0_4 = arith.constant 0 : index
    %2 = vector.load %arg3[%c0_3, %c0_4] : memref<16x128xf32, #tpu.memory_space<vmem>>, vector<16x128xf32>
    %cst = arith.constant dense<0.000000e+00> : vector<8x128xf32>
    %3 = tpu.matmul %0, %2, %cst {dimension_numbers = #tpu.dot_dimension_numbers<[1], [0], [0], [1], [0, 0, 1, 1], [], []>} : vector<8x16xf32>, vector<16x128xf32>, vector<8x128xf32> -> vector<8x128xf32>
    %c0_5 = arith.constant 0 : index
    %c0_6 = arith.constant 0 : index
    %4 = vector.load %arg4[%c0_5, %c0_6] : memref<16x128xf32, #tpu.memory_space<vmem>>, vector<16x128xf32>
    %cst_7 = arith.constant dense<0.000000e+00> : vector<8x128xf32>
    %5 = tpu.matmul %1, %4, %cst_7 {dimension_numbers = #tpu.dot_dimension_numbers<[1], [0], [0], [1], [0, 0, 1, 1], [], []>} : vector<8x16xf32>, vector<16x128xf32>, vector<8x128xf32> -> vector<8x128xf32>
    %6 = arith.addf %3, %5 : vector<8x128xf32>
    %c0_8 = arith.constant 0 : index
    %c0_9 = arith.constant 0 : index
    %7 = vector.load %arg5[%c0_8, %c0_9] : memref<1x128xf32, #tpu.memory_space<vmem>>, vector<1x128xf32>
    %8 = vector.broadcast %7 : vector<1x128xf32> to vector<8x128xf32>
    %9 = arith.addf %6, %8 : vector<8x128xf32>
    %cst_10 = arith.constant 0.000000e+00 : f32
    %10 = vector.broadcast %cst_10 : f32 to vector<8x128xf32>
    %11 = arith.maximumf %9, %10 : vector<8x128xf32>
    %c0_11 = arith.constant 0 : index
    %c0_12 = arith.constant 0 : index
    %12 = vector.load %arg6[%c0_11, %c0_12] : memref<128x128xf32, #tpu.memory_space<vmem>>, vector<128x128xf32>
    %cst_13 = arith.constant dense<0.000000e+00> : vector<8x128xf32>
    %13 = tpu.matmul %11, %12, %cst_13 {dimension_numbers = #tpu.dot_dimension_numbers<[1], [0], [0], [1], [0, 0, 1, 1], [], []>} : vector<8x128xf32>, vector<128x128xf32>, vector<8x128xf32> -> vector<8x128xf32>
    %c0_14 = arith.constant 0 : index
    %c0_15 = arith.constant 0 : index
    %14 = vector.load %arg7[%c0_14, %c0_15] : memref<1x128xf32, #tpu.memory_space<vmem>>, vector<1x128xf32>
    %15 = vector.broadcast %14 : vector<1x128xf32> to vector<8x128xf32>
    %16 = arith.addf %13, %15 : vector<8x128xf32>
    %cst_16 = arith.constant 0.000000e+00 : f32
    %17 = vector.broadcast %cst_16 : f32 to vector<8x128xf32>
    %18 = arith.maximumf %16, %17 : vector<8x128xf32>
    %c0_17 = arith.constant 0 : index
    %c0_18 = arith.constant 0 : index
    %19 = vector.load %arg8[%c0_17, %c0_18] : memref<128x128xf32, #tpu.memory_space<vmem>>, vector<128x128xf32>
    %cst_19 = arith.constant dense<0.000000e+00> : vector<8x128xf32>
    %20 = tpu.matmul %18, %19, %cst_19 {dimension_numbers = #tpu.dot_dimension_numbers<[1], [0], [0], [1], [0, 0, 1, 1], [], []>} : vector<8x128xf32>, vector<128x128xf32>, vector<8x128xf32> -> vector<8x128xf32>
    %c0_20 = arith.constant 0 : index
    %c0_21 = arith.constant 0 : index
    %21 = vector.load %arg9[%c0_20, %c0_21] : memref<1x128xf32, #tpu.memory_space<vmem>>, vector<1x128xf32>
    %22 = vector.broadcast %21 : vector<1x128xf32> to vector<8x128xf32>
    %23 = arith.addf %20, %22 : vector<8x128xf32>
    %24 = arith.negf %23 : vector<8x128xf32>
    %25 = math.exp %24 : vector<8x128xf32>
    %cst_22 = arith.constant 1.000000e+00 : f32
    %26 = vector.broadcast %cst_22 : f32 to vector<8x128xf32>
    %27 = arith.addf %26, %25 : vector<8x128xf32>
    %28 = arith.divf %26, %27 : vector<8x128xf32>
    %c0_23 = arith.constant 0 : index
    %c0_24 = arith.constant 0 : index
    %29 = vector.load %arg10[%c0_23, %c0_24] : memref<8x128xf32, #tpu.memory_space<vmem>>, vector<8x128xf32>
    tpu.vector_store %arg10[%c0_23, %c0_24], %28 {strides = array<i32>} : memref<8x128xf32, #tpu.memory_space<vmem>>, vector<8x128xf32>,
    return
  }
  func.func @transform_0(%arg0: i32) -> (i32, i32) {
    %c0_i32 = arith.constant 0 : i32
    %c0_i32_0 = arith.constant 0 : i32
    return %arg0, %c0_i32 : i32, i32
  }
  func.func @transform_1(%arg0: i32) -> (i32, i32) {
    %c0_i32 = arith.constant 0 : i32
    %c0_i32_0 = arith.constant 0 : i32
    return %arg0, %c0_i32 : i32, i32
  }
  func.func @transform_2(%arg0: i32) -> (i32, i32) {
    %c0_i32 = arith.constant 0 : i32
    %c0_i32_0 = arith.constant 0 : i32
    %c0_i32_1 = arith.constant 0 : i32
    return %c0_i32, %c0_i32_0 : i32, i32
  }
  func.func @transform_3(%arg0: i32) -> (i32, i32) {
    %c0_i32 = arith.constant 0 : i32
    %c0_i32_0 = arith.constant 0 : i32
    %c0_i32_1 = arith.constant 0 : i32
    return %c0_i32, %c0_i32_0 : i32, i32
  }
  func.func @transform_4(%arg0: i32) -> (i32, i32) {
    %c0_i32 = arith.constant 0 : i32
    %c0_i32_0 = arith.constant 0 : i32
    %c0_i32_1 = arith.constant 0 : i32
    return %c0_i32, %c0_i32_0 : i32, i32
  }
  func.func @transform_5(%arg0: i32) -> (i32, i32) {
    %c0_i32 = arith.constant 0 : i32
    %c0_i32_0 = arith.constant 0 : i32
    %c0_i32_1 = arith.constant 0 : i32
    return %c0_i32, %c0_i32_0 : i32, i32
  }
  func.func @transform_6(%arg0: i32) -> (i32, i32) {
    %c0_i32 = arith.constant 0 : i32
    %c0_i32_0 = arith.constant 0 : i32
    %c0_i32_1 = arith.constant 0 : i32
    return %c0_i32, %c0_i32_0 : i32, i32
  }
  func.func @transform_7(%arg0: i32) -> (i32, i32) {
    %c0_i32 = arith.constant 0 : i32
    %c0_i32_0 = arith.constant 0 : i32
    %c0_i32_1 = arith.constant 0 : i32
    return %c0_i32, %c0_i32_0 : i32, i32
  }
  func.func @transform_8(%arg0: i32) -> (i32, i32) {
    %c0_i32 = arith.constant 0 : i32
    %c0_i32_0 = arith.constant 0 : i32
    %c0_i32_1 = arith.constant 0 : i32
    return %c0_i32, %c0_i32_0 : i32, i32
  }
  func.func @transform_9(%arg0: i32) -> (i32, i32) {
    %c0_i32 = arith.constant 0 : i32
    %c0_i32_0 = arith.constant 0 : i32
    return %arg0, %c0_i32 : i32, i32
  }
}

</mosaic_0001>

<llo_original>
// kernel: tpu_custom_call.1
$region0: #{tpu_custom_call.1}
  #allocation0 [shape = 'u32[]', space=smem, size = 0x4, offset = 0x4, fixed_abs, tag = 'smem constant byte address 0x4 - core index']
  #allocation1 [shape = 'u32[144,128]{1,0:T(1,128)}', space=vmem, size = 0x12000, scoped, tag = 'internal scratch']
  %s0 = inlined_call_operand.hbm [shape: f32[8,16], index: 0, kind: input, shape index: {}]
  %s1 = inlined_call_operand.hbm [shape: f32[8,16], index: 1, kind: input, shape index: {}]
  %s2 = inlined_call_operand.hbm [shape: f32[16,128], index: 2, kind: input, shape index: {}]
  %s3 = inlined_call_operand.hbm [shape: f32[16,128], index: 3, kind: input, shape index: {}]
  %s4 = inlined_call_operand.vmem [shape: f32[1,128], index: 4, kind: input, shape index: {}]
  %s5 = inlined_call_operand.hbm [shape: f32[128,128], index: 5, kind: input, shape index: {}]
  %s6 = inlined_call_operand.vmem [shape: f32[1,128], index: 6, kind: input, shape index: {}]
  %s7 = inlined_call_operand.hbm [shape: f32[128,128], index: 7, kind: input, shape index: {}]
  %s8 = inlined_call_operand.vmem [shape: f32[1,128], index: 8, kind: input, shape index: {}]
  %s9 = inlined_call_operand.hbm [shape: f32[8,128], index: 9, kind: output, shape index: {}]
  %s10 = sld [smem:[#allocation0]]
  $region70: #{tpu_custom_call.1} parent=0
    _
  %s12 = ssub.s32 1, %s10
  %s13 = scalar_select 0, %s12, %s10
  $region1: #{tpu_custom_call.1} parent=0
    #allocation2 [shape = 'u8[4096]{0}', space=vmem, size = 0x1000, scoped, tag = 'input window, operand 0, single buffered']
    #allocation3 [shape = 's32[1]{0}', space=sflag, size = 0x4, scoped, tag = 'scoped memory for tpu_custom_call.1']
    #allocation4 [shape = 's32[1]{0}', space=sflag, size = 0x4, scoped, tag = 'scoped memory for tpu_custom_call.1']
    #allocation5 [shape = 'u8[4096]{0}', space=vmem, size = 0x1000, scoped, tag = 'input window, operand 1, single buffered']
    #allocation6 [shape = 's32[1]{0}', space=sflag, size = 0x4, scoped, tag = 'scoped memory for tpu_custom_call.1']
    #allocation7 [shape = 'u8[8192]{0}', space=vmem, size = 0x2000, scoped, tag = 'input window, operand 2, single buffered']
    #allocation8 [shape = 'u8[8192]{0}', space=vmem, size = 0x2000, scoped, tag = 'input window, operand 3, single buffered']
    #allocation9 [shape = 's32[1]{0}', space=sflag, size = 0x4, scoped, tag = 'scoped memory for tpu_custom_call.1']
    #allocation10 [shape = 'u8[65536]{0}', space=vmem, size = 0x10000, scoped, tag = 'input window, operand 5, single buffered']
    #allocation11 [shape = 'u8[65536]{0}', space=vmem, size = 0x10000, scoped, tag = 'input window, operand 7, single buffered']
    #allocation12 [shape = 's32[1]{0}', space=sflag, size = 0x4, scoped, tag = 'scoped memory for tpu_custom_call.1']
    #allocation13 [shape = 'u8[4096]{0}', space=vmem, size = 0x1000, scoped, tag = 'output window, operand 0, single buffered']
    %14 = vsyncpa [#allocation3], 0
    %15 = vsyncpa [#allocation6], 0
    %16 = vsyncpa [#allocation9], 0
    %17 = vsyncpa [#allocation12], 0
    %18 = vsyncpa [#allocation4], 0
    // Predicated region
    $region2: #{tpu_custom_call.1} parent=1 // pred_check
      _
    $region3: #{tpu_custom_call.1} parent=1 // pred_check_branch
      %20 = sbr.rel (0) target = $region5
    $region4: #{tpu_custom_call.1} parent=1 // pred_region
      %s22 = ssub.s32 128, 128
      %23 = vsyncadd [#allocation3], %s22
      %s25 = sshll.u32 [#allocation2], 4
      %s26 = int_to_ptr.vmem [resolvable:$true] %s25
      %28 = dma.hbm_to_vmem [thread:$0]  %s0, 128, %s26, [#allocation3]
    $region5: #{tpu_custom_call.1} parent=1 // pred_fallthru
      _
    // Predicated region
    $region6: #{tpu_custom_call.1} parent=1 // pred_check
      _
    $region7: #{tpu_custom_call.1} parent=1 // pred_check_branch
      %30 = sbr.rel (0) target = $region9
    $region8: #{tpu_custom_call.1} parent=1 // pred_region
      %s32 = ssub.s32 128, 128
      %33 = vsyncadd [#allocation6], %s32
      %s35 = sshll.u32 [#allocation5], 4
      %s36 = int_to_ptr.vmem [resolvable:$true] %s35
      %38 = dma.hbm_to_vmem [thread:$0]  %s1, 128, %s36, [#allocation6]
    $region9: #{tpu_custom_call.1} parent=1 // pred_fallthru
      _
    // Predicated region
    $region10: #{tpu_custom_call.1} parent=1 // pred_check
      _
    $region11: #{tpu_custom_call.1} parent=1 // pred_check_branch
      %40 = sbr.rel (0) target = $region13
    $region12: #{tpu_custom_call.1} parent=1 // pred_region
      %s42 = ssub.s32 256, 256
      %43 = vsyncadd [#allocation6], %s42
      %s44 = sshll.u32 [#allocation7], 4
      %s45 = int_to_ptr.vmem [resolvable:$true] %s44
      %50 = dma.hbm_to_vmem [thread:$0]  %s2, 256, %s45, [#allocation6], 128, 128, 8
    $region13: #{tpu_custom_call.1} parent=1 // pred_fallthru
      _
    // Predicated region
    $region14: #{tpu_custom_call.1} parent=1 // pred_check
      _
    $region15: #{tpu_custom_call.1} parent=1 // pred_check_branch
      %52 = sbr.rel (0) target = $region17
    $region16: #{tpu_custom_call.1} parent=1 // pred_region
      %s54 = ssub.s32 256, 256
      %55 = vsyncadd [#allocation9], %s54
      %s56 = sshll.u32 [#allocation8], 4
      %s57 = int_to_ptr.vmem [resolvable:$true] %s56
      %62 = dma.hbm_to_vmem [thread:$0]  %s3, 256, %s57, [#allocation9], 128, 128, 8
    $region17: #{tpu_custom_call.1} parent=1 // pred_fallthru
      _
    // Predicated region
    $region18: #{tpu_custom_call.1} parent=1 // pred_check
      _
    $region19: #{tpu_custom_call.1} parent=1 // pred_check_branch
      %64 = sbr.rel (0) target = $region21
    $region20: #{tpu_custom_call.1} parent=1 // pred_region
      _
    $region21: #{tpu_custom_call.1} parent=1 // pred_fallthru
      _
    // Predicated region
    $region22: #{tpu_custom_call.1} parent=1 // pred_check
      _
    $region23: #{tpu_custom_call.1} parent=1 // pred_check_branch
      %66 = sbr.rel (0) target = $region25
    $region24: #{tpu_custom_call.1} parent=1 // pred_region
      %s68 = ssub.s32 2048, 2048
      %69 = vsyncadd [#allocation9], %s68
      %s70 = sshll.u32 [#allocation10], 4
      %s71 = int_to_ptr.vmem [resolvable:$true] %s70
      %76 = dma.hbm_to_vmem [thread:$0]  %s5, 2048, %s71, [#allocation9], 128, 128, 8
    $region25: #{tpu_custom_call.1} parent=1 // pred_fallthru
      _
    // Predicated region
    $region26: #{tpu_custom_call.1} parent=1 // pred_check
      _
    $region27: #{tpu_custom_call.1} parent=1 // pred_check_branch
      %78 = sbr.rel (0) target = $region29
    $region28: #{tpu_custom_call.1} parent=1 // pred_region
      _
    $region29: #{tpu_custom_call.1} parent=1 // pred_fallthru
      _
    // Predicated region
    $region30: #{tpu_custom_call.1} parent=1 // pred_check
      _
    $region31: #{tpu_custom_call.1} parent=1 // pred_check_branch
      %80 = sbr.rel (0) target = $region33
    $region32: #{tpu_custom_call.1} parent=1 // pred_region
      %s82 = ssub.s32 2048, 2048
      %83 = vsyncadd [#allocation12], %s82
      %s84 = sshll.u32 [#allocation11], 4
      %s85 = int_to_ptr.vmem [resolvable:$true] %s84
      %90 = dma.hbm_to_vmem [thread:$0]  %s7, 2048, %s85, [#allocation12], 128, 128, 8
    $region33: #{tpu_custom_call.1} parent=1 // pred_fallthru
      _
    // Predicated region
    $region34: #{tpu_custom_call.1} parent=1 // pred_check
      _
    $region35: #{tpu_custom_call.1} parent=1 // pred_check_branch
      %92 = sbr.rel (0) target = $region37
    $region36: #{tpu_custom_call.1} parent=1 // pred_region
      _
    $region37: #{tpu_custom_call.1} parent=1 // pred_fallthru
      _
    // Predicated region
    $region38: #{tpu_custom_call.1} parent=1 // pred_check
      _
    $region39: #{tpu_custom_call.1} parent=1 // pred_check_branch
      %94 = sbr.rel (0) target = $region41
    $region40: #{tpu_custom_call.1} parent=1 // pred_region
      %95 = dma.done [#allocation3], 128
    $region41: #{tpu_custom_call.1} parent=1 // pred_fallthru
      _
    // Predicated region
    $region42: #{tpu_custom_call.1} parent=1 // pred_check
      _
    $region43: #{tpu_custom_call.1} parent=1 // pred_check_branch
      %97 = sbr.rel (0) target = $region45
    $region44: #{tpu_custom_call.1} parent=1 // pred_region
      %98 = dma.done [#allocation6], 128
    $region45: #{tpu_custom_call.1} parent=1 // pred_fallthru
      _
    // Predicated region
    $region46: #{tpu_custom_call.1} parent=1 // pred_check
      _
    $region47: #{tpu_custom_call.1} parent=1 // pred_check_branch
      %100 = sbr.rel (0) target = $region49
    $region48: #{tpu_custom_call.1} parent=1 // pred_region
      %101 = dma.done [#allocation6], 256
    $region49: #{tpu_custom_call.1} parent=1 // pred_fallthru
      _
    // Predicated region
    $region50: #{tpu_custom_call.1} parent=1 // pred_check
      _
    $region51: #{tpu_custom_call.1} parent=1 // pred_check_branch
      %103 = sbr.rel (0) target = $region53
    $region52: #{tpu_custom_call.1} parent=1 // pred_region
      %104 = dma.done [#allocation9], 256
    $region53: #{tpu_custom_call.1} parent=1 // pred_fallthru
      _
    // Predicated region
    $region54: #{tpu_custom_call.1} parent=1 // pred_check
      _
    $region55: #{tpu_custom_call.1} parent=1 // pred_check_branch
      %106 = sbr.rel (0) target = $region57
    $region56: #{tpu_custom_call.1} parent=1 // pred_region
      %107 = dma.done [#allocation9], 2048
    $region57: #{tpu_custom_call.1} parent=1 // pred_fallthru
      _
    // Predicated region
    $region58: #{tpu_custom_call.1} parent=1 // pred_check
      _
    $region59: #{tpu_custom_call.1} parent=1 // pred_check_branch
      %109 = sbr.rel (0) target = $region61
    $region60: #{tpu_custom_call.1} parent=1 // pred_region
      %110 = dma.done [#allocation12], 2048
    $region61: #{tpu_custom_call.1} parent=1 // pred_fallthru
      _
    %v111 = vld [vmem:[#allocation2] sm:$0xff]
    %v112 = vld [vmem:[#allocation5] sm:$0xff]
    %v113 = vld [vmem:[#allocation7] sm:$0xff]
    %v114 = vld [vmem:[#allocation7 + $0x8] sm:$0xff]
    %v115 = vld [vmem:[#allocation8] sm:$0xff]
    %v116 = vld [vmem:[#allocation8 + $0x8] sm:$0xff]
    %vm117 = vcmask 130048
    %v119 = vsel %vm117, %v112, 0
    %121 = vmatprep.subr.mxu0 0.0
    %122 = vmatpush1.msra.mxu0 %v115
    %123 = vmatprep.subr.mxu0 0.0
    %124 = vmatpush1.msra.mxu0 %v116
    %125 = vmatprep.subr.mxu0 0.0
    %126 = vmatpush1.msra.mxu0 0.0
    %127 = vmatprep.subr.mxu0 0.0
    %128 = vmatpush1.msra.mxu0 0.0
    %129 = vmatprep.subr.mxu0 0.0
    %130 = vmatpush1.msra.mxu0 0.0
    %131 = vmatprep.subr.mxu0 0.0
    %132 = vmatpush1.msra.mxu0 0.0
    %133 = vmatprep.subr.mxu0 0.0
    %134 = vmatpush1.msra.mxu0 0.0
    %135 = vmatprep.subr.mxu0 0.0
    %136 = vmatpush1.msra.mxu0 0.0
    %137 = vmatprep.subr.mxu0 0.0
    %138 = vmatpush1.msra.mxu0 0.0
    %139 = vmatprep.subr.mxu0 0.0
    %140 = vmatpush1.msra.mxu0 0.0
    %141 = vmatprep.subr.mxu0 0.0
    %142 = vmatpush1.msra.mxu0 0.0
    %143 = vmatprep.subr.mxu0 0.0
    %144 = vmatpush1.msra.mxu0 0.0
    %145 = vmatprep.subr.mxu0 0.0
    %146 = vmatpush1.msra.mxu0 0.0
    %147 = vmatprep.subr.mxu0 0.0
    %148 = vmatpush1.msra.mxu0 0.0
    %149 = vmatprep.subr.mxu0 0.0
    %150 = vmatpush1.msra.mxu0 0.0
    %151 = vmatprep.subr.mxu0 0.0
    %152 = vmatpush1.msra.mxu0 0.0
    %153 = vmatprep.subr.mxu0 0.0
    %154 = vmatpush1.msra.mxu0 0.0
    %155 = vmatprep.subr.mxu0 0.0
    %156 = vmatpush1.msra.mxu0 0.0
    %157 = vmatprep.subr.mxu0 0.0
    %158 = vmatpush1.msra.mxu0 0.0
    %159 = vmatprep.subr.mxu0 0.0
    %160 = vmatpush1.msra.mxu0 0.0
    %161 = vmatprep.subr.mxu0 0.0
    %162 = vmatpush1.msra.mxu0 0.0
    %163 = vmatprep.subr.mxu0 0.0
    %164 = vmatpush1.msra.mxu0 0.0
    %165 = vmatprep.subr.mxu0 0.0
    %166 = vmatpush1.msra.mxu0 0.0
    %167 = vmatprep.subr.mxu0 0.0
    %168 = vmatpush1.msra.mxu0 0.0
    %169 = vmatprep.subr.mxu0 0.0
    %170 = vmatpush1.msra.mxu0 0.0
    %171 = vmatprep.subr.mxu0 0.0
    %172 = vmatpush1.msra.mxu0 0.0
    %173 = vmatprep.subr.mxu0 0.0
    %174 = vmatpush1.msra.mxu0 0.0
    %175 = vmatprep.subr.mxu0 0.0
    %176 = vmatpush1.msra.mxu0 0.0
    %177 = vmatprep.subr.mxu0 0.0
    %178 = vmatpush1.msra.mxu0 0.0
    %179 = vmatprep.subr.mxu0 0.0
    %180 = vmatpush1.msra.mxu0 0.0
    %181 = vmatprep.subr.mxu0 0.0
    %182 = vmatpush1.msra.mxu0 0.0
    %183 = vmatprep.subr.mxu0 0.0
    %184 = vmatpush1.msra.mxu0 0.0
    %185 = vmatprep.mubr.f32.mxu0 0.0
    %186 = vmatmul.mubr.f32.gmra.mrb[0].mxu0 %v119
    %v187 = vpop.f32.mrb[0].mxu0
    %v188 = vadd.f32 0.0, %v187
    %v189 = vpop.f32.mrb[0].mxu0
    %190 = vdwg.mxu0
    %v192 = vsel %vm117, %v111, 0
    %194 = vmatprep.subr.mxu0 0.0
    %195 = vmatpush1.msra.mxu0 %v113
    %196 = vmatprep.subr.mxu0 0.0
    %197 = vmatpush1.msra.mxu0 %v114
    %198 = vmatprep.subr.mxu0 0.0
    %199 = vmatpush1.msra.mxu0 0.0
    %200 = vmatprep.subr.mxu0 0.0
    %201 = vmatpush1.msra.mxu0 0.0
    %202 = vmatprep.subr.mxu0 0.0
    %203 = vmatpush1.msra.mxu0 0.0
    %204 = vmatprep.subr.mxu0 0.0
    %205 = vmatpush1.msra.mxu0 0.0
    %206 = vmatprep.subr.mxu0 0.0
    %207 = vmatpush1.msra.mxu0 0.0
    %208 = vmatprep.subr.mxu0 0.0
    %209 = vmatpush1.msra.mxu0 0.0
    %210 = vmatprep.subr.mxu0 0.0
    %211 = vmatpush1.msra.mxu0 0.0
    %212 = vmatprep.subr.mxu0 0.0
    %213 = vmatpush1.msra.mxu0 0.0
    %214 = vmatprep.subr.mxu0 0.0
    %215 = vmatpush1.msra.mxu0 0.0
    %216 = vmatprep.subr.mxu0 0.0
    %217 = vmatpush1.msra.mxu0 0.0
    %218 = vmatprep.subr.mxu0 0.0
    %219 = vmatpush1.msra.mxu0 0.0
    %220 = vmatprep.subr.mxu0 0.0
    %221 = vmatpush1.msra.mxu0 0.0
    %222 = vmatprep.subr.mxu0 0.0
    %223 = vmatpush1.msra.mxu0 0.0
    %224 = vmatprep.subr.mxu0 0.0
    %225 = vmatpush1.msra.mxu0 0.0
    %226 = vmatprep.subr.mxu0 0.0
    %227 = vmatpush1.msra.mxu0 0.0
    %228 = vmatprep.subr.mxu0 0.0
    %229 = vmatpush1.msra.mxu0 0.0
    %230 = vmatprep.subr.mxu0 0.0
    %231 = vmatpush1.msra.mxu0 0.0
    %232 = vmatprep.subr.mxu0 0.0
    %233 = vmatpush1.msra.mxu0 0.0
    %234 = vmatprep.subr.mxu0 0.0
    %235 = vmatpush1.msra.mxu0 0.0
    %236 = vmatprep.subr.mxu0 0.0
    %237 = vmatpush1.msra.mxu0 0.0
    %238 = vmatprep.subr.mxu0 0.0
    %239 = vmatpush1.msra.mxu0 0.0
    %240 = vmatprep.subr.mxu0 0.0
    %241 = vmatpush1.msra.mxu0 0.0
    %242 = vmatprep.subr.mxu0 0.0
    %243 = vmatpush1.msra.mxu0 0.0
    %244 = vmatprep.subr.mxu0 0.0
    %245 = vmatpush1.msra.mxu0 0.0
    %246 = vmatprep.subr.mxu0 0.0
    %247 = vmatpush1.msra.mxu0 0.0
    %248 = vmatprep.subr.mxu0 0.0
    %249 = vmatpush1.msra.mxu0 0.0
    %250 = vmatprep.subr.mxu0 0.0
    %251 = vmatpush1.msra.mxu0 0.0
    %252 = vmatprep.subr.mxu0 0.0
    %253 = vmatpush1.msra.mxu0 0.0
    %254 = vmatprep.subr.mxu0 0.0
    %255 = vmatpush1.msra.mxu0 0.0
    %256 = vmatprep.subr.mxu0 0.0
    %257 = vmatpush1.msra.mxu0 0.0
    %258 = vmatprep.mubr.f32.mxu0 0.0
    %259 = vmatmul.mubr.f32.gmra.mrb[0].mxu0 %v192
    %v260 = vpop.f32.mrb[0].mxu0
    %v261 = vadd.f32 %v188, %v260
    %v262 = vpop.f32.mrb[0].mxu0
    %263 = vdwg.mxu0
    %v264 = vld [vmem:[%s4] sm:$0x1]
    %v266 = vlaneseq
    %v267 = vshrl.u32 %v266, 7
    %v268 = vsub.s32 0, %v267
    %v269 = vrot.slane %v264, %v268
    %v271 = vadd.f32 %v261, %v269
    %v272 = vmax.f32 %v271, 0.0
    %v273 = vld [vmem:[#allocation10] sm:$0xff]
    %v274 = vld [vmem:[#allocation10 + $0x8] sm:$0xff]
    %v275 = vld [vmem:[#allocation10 + $0x10] sm:$0xff]
    %v276 = vld [vmem:[#allocation10 + $0x18] sm:$0xff]
    %v277 = vld [vmem:[#allocation10 + $0x20] sm:$0xff]
    %v278 = vld [vmem:[#allocation10 + $0x28] sm:$0xff]
    %v279 = vld [vmem:[#allocation10 + $0x30] sm:$0xff]
    %v280 = vld [vmem:[#allocation10 + $0x38] sm:$0xff]
    %v281 = vld [vmem:[#allocation10 + $0x40] sm:$0xff]
    %v282 = vld [vmem:[#allocation10 + $0x48] sm:$0xff]
    %v283 = vld [vmem:[#allocation10 + $0x50] sm:$0xff]
    %v284 = vld [vmem:[#allocation10 + $0x58] sm:$0xff]
    %v285 = vld [vmem:[#allocation10 + $0x60] sm:$0xff]
    %v286 = vld [vmem:[#allocation10 + $0x68] sm:$0xff]
    %v287 = vld [vmem:[#allocation10 + $0x70] sm:$0xff]
    %v288 = vld [vmem:[#allocation10 + $0x78] sm:$0xff]
    %v289 = vld [vmem:[%s6] sm:$0x1]
    %v291 = vlaneseq
    %v292 = vshrl.u32 %v291, 7
    %v293 = vsub.s32 0, %v292
    %v294 = vrot.slane %v289, %v293
    %296 = vmatprep.subr.mxu0 0.0
    %297 = vmatpush1.msra.mxu0 %v273
    %298 = vmatprep.subr.mxu0 0.0
    %299 = vmatpush1.msra.mxu0 %v274
    %300 = vmatprep.subr.mxu0 0.0
    %301 = vmatpush1.msra.mxu0 %v275
    %302 = vmatprep.subr.mxu0 0.0
    %303 = vmatpush1.msra.mxu0 %v276
    %304 = vmatprep.subr.mxu0 0.0
    %305 = vmatpush1.msra.mxu0 %v277
    %306 = vmatprep.subr.mxu0 0.0
    %307 = vmatpush1.msra.mxu0 %v278
    %308 = vmatprep.subr.mxu0 0.0
    %309 = vmatpush1.msra.mxu0 %v279
    %310 = vmatprep.subr.mxu0 0.0
    %311 = vmatpush1.msra.mxu0 %v280
    %312 = vmatprep.subr.mxu0 0.0
    %313 = vmatpush1.msra.mxu0 %v281
    %314 = vmatprep.subr.mxu0 0.0
    %315 = vmatpush1.msra.mxu0 %v282
    %316 = vmatprep.subr.mxu0 0.0
    %317 = vmatpush1.msra.mxu0 %v283
    %318 = vmatprep.subr.mxu0 0.0
    %319 = vmatpush1.msra.mxu0 %v284
    %320 = vmatprep.subr.mxu0 0.0
    %321 = vmatpush1.msra.mxu0 %v285
    %322 = vmatprep.subr.mxu0 0.0
    %323 = vmatpush1.msra.mxu0 %v286
    %324 = vmatprep.subr.mxu0 0.0
    %325 = vmatpush1.msra.mxu0 %v287
    %326 = vmatprep.subr.mxu0 0.0
    %327 = vmatpush1.msra.mxu0 %v288
    %328 = vmatprep.subr.mxu0 0.0
    %329 = vmatpush1.msra.mxu0 0.0
    %330 = vmatprep.subr.mxu0 0.0
    %331 = vmatpush1.msra.mxu0 0.0
    %332 = vmatprep.subr.mxu0 0.0
    %333 = vmatpush1.msra.mxu0 0.0
    %334 = vmatprep.subr.mxu0 0.0
    %335 = vmatpush1.msra.mxu0 0.0
    %336 = vmatprep.subr.mxu0 0.0
    %337 = vmatpush1.msra.mxu0 0.0
    %338 = vmatprep.subr.mxu0 0.0
    %339 = vmatpush1.msra.mxu0 0.0
    %340 = vmatprep.subr.mxu0 0.0
    %341 = vmatpush1.msra.mxu0 0.0
    %342 = vmatprep.subr.mxu0 0.0
    %343 = vmatpush1.msra.mxu0 0.0
    %344 = vmatprep.subr.mxu0 0.0
    %345 = vmatpush1.msra.mxu0 0.0
    %346 = vmatprep.subr.mxu0 0.0
    %347 = vmatpush1.msra.mxu0 0.0
    %348 = vmatprep.subr.mxu0 0.0
    %349 = vmatpush1.msra.mxu0 0.0
    %350 = vmatprep.subr.mxu0 0.0
    %351 = vmatpush1.msra.mxu0 0.0
    %352 = vmatprep.subr.mxu0 0.0
    %353 = vmatpush1.msra.mxu0 0.0
    %354 = vmatprep.subr.mxu0 0.0
    %355 = vmatpush1.msra.mxu0 0.0
    %356 = vmatprep.subr.mxu0 0.0
    %357 = vmatpush1.msra.mxu0 0.0
    %358 = vmatprep.subr.mxu0 0.0
    %359 = vmatpush1.msra.mxu0 0.0
    %360 = vmatprep.mubr.f32.mxu0 0.0
    %361 = vmatmul.mubr.f32.gmra.mrb[0].mxu0 %v272
    %v362 = vpop.f32.mrb[0].mxu0
    %v363 = vadd.f32 %v294, %v362
    %v364 = vpop.f32.mrb[0].mxu0
    %365 = vdwg.mxu0
    %v366 = vmax.f32 %v363, 0.0
    %v367 = vld [vmem:[#allocation11] sm:$0xff]
    %v368 = vld [vmem:[#allocation11 + $0x8] sm:$0xff]
    %v369 = vld [vmem:[#allocation11 + $0x10] sm:$0xff]
    %v370 = vld [vmem:[#allocation11 + $0x18] sm:$0xff]
    %v371 = vld [vmem:[#allocation11 + $0x20] sm:$0xff]
    %v372 = vld [vmem:[#allocation11 + $0x28] sm:$0xff]
    %v373 = vld [vmem:[#allocation11 + $0x30] sm:$0xff]
    %v374 = vld [vmem:[#allocation11 + $0x38] sm:$0xff]
    %v375 = vld [vmem:[#allocation11 + $0x40] sm:$0xff]
    %v376 = vld [vmem:[#allocation11 + $0x48] sm:$0xff]
    %v377 = vld [vmem:[#allocation11 + $0x50] sm:$0xff]
    %v378 = vld [vmem:[#allocation11 + $0x58] sm:$0xff]
    %v379 = vld [vmem:[#allocation11 + $0x60] sm:$0xff]
    %v380 = vld [vmem:[#allocation11 + $0x68] sm:$0xff]
    %v381 = vld [vmem:[#allocation11 + $0x70] sm:$0xff]
    %v382 = vld [vmem:[#allocation11 + $0x78] sm:$0xff]
    %v383 = vld [vmem:[%s8] sm:$0x1]
    %v385 = vlaneseq
    %v386 = vshrl.u32 %v385, 7
    %v387 = vsub.s32 0, %v386
    %v388 = vrot.slane %v383, %v387
    %390 = vmatprep.subr.mxu0 0.0
    %391 = vmatpush1.msra.mxu0 %v367
    %392 = vmatprep.subr.mxu0 0.0
    %393 = vmatpush1.msra.mxu0 %v368
    %394 = vmatprep.subr.mxu0 0.0
    %395 = vmatpush1.msra.mxu0 %v369
    %396 = vmatprep.subr.mxu0 0.0
    %397 = vmatpush1.msra.mxu0 %v370
    %398 = vmatprep.subr.mxu0 0.0
    %399 = vmatpush1.msra.mxu0 %v371
    %400 = vmatprep.subr.mxu0 0.0
    %401 = vmatpush1.msra.mxu0 %v372
    %402 = vmatprep.subr.mxu0 0.0
    %403 = vmatpush1.msra.mxu0 %v373
    %404 = vmatprep.subr.mxu0 0.0
    %405 = vmatpush1.msra.mxu0 %v374
    %406 = vmatprep.subr.mxu0 0.0
    %407 = vmatpush1.msra.mxu0 %v375
    %408 = vmatprep.subr.mxu0 0.0
    %409 = vmatpush1.msra.mxu0 %v376
    %410 = vmatprep.subr.mxu0 0.0
    %411 = vmatpush1.msra.mxu0 %v377
    %412 = vmatprep.subr.mxu0 0.0
    %413 = vmatpush1.msra.mxu0 %v378
    %414 = vmatprep.subr.mxu0 0.0
    %415 = vmatpush1.msra.mxu0 %v379
    %416 = vmatprep.subr.mxu0 0.0
    %417 = vmatpush1.msra.mxu0 %v380
    %418 = vmatprep.subr.mxu0 0.0
    %419 = vmatpush1.msra.mxu0 %v381
    %420 = vmatprep.subr.mxu0 0.0
    %421 = vmatpush1.msra.mxu0 %v382
    %422 = vmatprep.subr.mxu0 0.0
    %423 = vmatpush1.msra.mxu0 0.0
    %424 = vmatprep.subr.mxu0 0.0
    %425 = vmatpush1.msra.mxu0 0.0
    %426 = vmatprep.subr.mxu0 0.0
    %427 = vmatpush1.msra.mxu0 0.0
    %428 = vmatprep.subr.mxu0 0.0
    %429 = vmatpush1.msra.mxu0 0.0
    %430 = vmatprep.subr.mxu0 0.0
    %431 = vmatpush1.msra.mxu0 0.0
    %432 = vmatprep.subr.mxu0 0.0
    %433 = vmatpush1.msra.mxu0 0.0
    %434 = vmatprep.subr.mxu0 0.0
    %435 = vmatpush1.msra.mxu0 0.0
    %436 = vmatprep.subr.mxu0 0.0
    %437 = vmatpush1.msra.mxu0 0.0
    %438 = vmatprep.subr.mxu0 0.0
    %439 = vmatpush1.msra.mxu0 0.0
    %440 = vmatprep.subr.mxu0 0.0
    %441 = vmatpush1.msra.mxu0 0.0
    %442 = vmatprep.subr.mxu0 0.0
    %443 = vmatpush1.msra.mxu0 0.0
    %444 = vmatprep.subr.mxu0 0.0
    %445 = vmatpush1.msra.mxu0 0.0
    %446 = vmatprep.subr.mxu0 0.0
    %447 = vmatpush1.msra.mxu0 0.0
    %448 = vmatprep.subr.mxu0 0.0
    %449 = vmatpush1.msra.mxu0 0.0
    %450 = vmatprep.subr.mxu0 0.0
    %451 = vmatpush1.msra.mxu0 0.0
    %452 = vmatprep.subr.mxu0 0.0
    %453 = vmatpush1.msra.mxu0 0.0
    %454 = vmatprep.mubr.f32.mxu0 0.0
    %455 = vmatmul.mubr.f32.gmra.mrb[0].mxu0 %v366
    %v456 = vpop.f32.mrb[0].mxu0
    %v457 = vadd.f32 %v388, %v456
    %v458 = vpop.f32.mrb[0].mxu0
    %459 = vdwg.mxu0
    %v460 = vxor.u32 %v457, 2147483648
    %v461 = vmul.f32 %v460, 1.442695
    %v462 = vpow.pop %v461
    %v463 = vadd.f32 %v462, 1.0
    %v464 = vrcp.pop %v463
    %v465 = vmul.f32 1.0, %v464
    %466 = vst [vmem:[#allocation13] sm:$0xff] %v465
    // Predicated region
    $region62: #{tpu_custom_call.1} parent=1 // pred_check
      _
    $region63: #{tpu_custom_call.1} parent=1 // pred_check_branch
      %468 = sbr.rel (0) target = $region65
    $region64: #{tpu_custom_call.1} parent=1 // pred_region
      %s470 = ssub.s32 128, 128
      %471 = vsyncadd [#allocation4], %s470
      %s473 = sshll.u32 [#allocation13], 4
      %s474 = int_to_ptr.vmem [resolvable:$true] %s473
      %476 = dma.vmem_to_hbm [thread:$0]  %s474, 128, %s9, [#allocation4]
    $region65: #{tpu_custom_call.1} parent=1 // pred_fallthru
      _
    // Predicated region
    $region66: #{tpu_custom_call.1} parent=1 // pred_check
      _
    $region67: #{tpu_custom_call.1} parent=1 // pred_check_branch
      %478 = sbr.rel (0) target = $region69
    $region68: #{tpu_custom_call.1} parent=1 // pred_region
      %479 = dma.done [#allocation4], 128
    $region69: #{tpu_custom_call.1} parent=1 // pred_fallthru
      _
    %480 = vsyncpa [#allocation3], 1
    %481 = vsyncpa [#allocation6], 1
    %482 = vsyncpa [#allocation9], 1
    %483 = vsyncpa [#allocation12], 1
    %484 = vsyncpa [#allocation4], 1

</llo_original>
